<compile_context>
chip_gen: v6e
topology: v6e:2x2x1
jax: 0.10.0
libtpu: 0.0.40
codegen_flags: <defaults>
</compile_context>

<pallas_src>
import math

import jax
import jax.numpy as jnp
from jax.experimental import pallas as pl
from jax.experimental.pallas import tpu as pltpu


def _round_up(a, b):
    return -(-a // b) * b


def _cdiv(a, b):
    return -(-a // b)


def _pe_kernel(pos_ref, m_ref, phase_ref, o_ref):
    # pos_ref:   (TILE_W, k)   -- k timesteps packed per wide output row
    # m_ref:     (k, k*D)      -- row-selector * div_term table (host precomputed)
    # phase_ref: (1, k*D)      -- 0 for even embedding lanes, pi/2 for odd lanes
    # o_ref:     (TILE_W, k*D) -- lane-dense output block
    pos = pos_ref[...]                      # (TILE_W, k) f32
    m = m_ref[...]                          # (k, k*D)    f32
    angle = phase_ref[...]                  # (1, k*D), broadcasts over sublanes
    k = pos.shape[1]
    # Exact f32 MAC chain (k <= 8, fully unrolled):
    #   angle[w, j] = pos[w, j // D] * div_term[j % D] + phase[j]
    # Kept on the VPU (not the MXU) so the argument of sin keeps full f32
    # precision -- see header note.
    for i in range(k):
        angle = angle + pos[:, i:i + 1] * m[i:i + 1, :]
    # One transcendental evaluation per element: sin(x) on even embedding lanes,
    # sin(x + pi/2) == cos(x) on odd lanes.  All math in f32; cast only on store.
    # TODO(synk): swap jnp.sin for a Cody-Waite + minimax polynomial if bundle
    # dumps confirm the VALU slot is the binding resource.
    o_ref[...] = jnp.sin(angle).astype(o_ref.dtype)


def positional_encoding(x, embed_dim, out_dtype=jnp.float32):
    """x: (B, T) timesteps. Returns (B, T, embed_dim) sinusoidal PE (f32 by default)."""
    assert embed_dim % 2 == 0, "PositionalEncoding requires an even embed_dim"
    B, T = x.shape
    D = embed_dim
    R = B * T
    x_flat = x.reshape(R).astype(jnp.float32)

    # --- Lane-packing factor: smallest k with (k*D) % 128 == 0, capped at 8 ---
    # (keeps output stores unmasked / 128-lane dense for D = 16, 32, 48, 64, 96,
    # 128, 192, 256, ...).  Fallback k = 1 uses masked stores but stays correct.
    k = 128 // math.gcd(D, 128)
    if k > 8:
        k = 1
    kD = k * D

    # --- Host-precomputed tables (tiny; no exp / cos / iota work in-kernel) ---
    d_idx = jnp.arange(kD, dtype=jnp.int32) % D                       # embed index per lane
    div_term = jnp.exp(
        (2 * (d_idx // 2)).astype(jnp.float32) * (-math.log(10000.0) / D)
    )                                                                 # (kD,)
    phase = jnp.where((d_idx % 2) == 0, 0.0, math.pi / 2.0).astype(jnp.float32)[None, :]
    row_sel = jnp.arange(kD, dtype=jnp.int32) // D                    # which packed slot owns lane j
    sel = (row_sel[None, :] == jnp.arange(k, dtype=jnp.int32)[:, None]).astype(jnp.float32)
    m_tbl = sel * div_term[None, :]                                   # (k, kD)

    # --- Tiling: ntiles first (>= 2 for megacore when enough rows), then tile_w ---
    out_itemsize = 2 if out_dtype == jnp.bfloat16 else 4
    sub = 16 if out_dtype == jnp.bfloat16 else 8                      # sublane granule
    W = _cdiv(R, k)                                                   # wide rows needed
    W_sub = _round_up(W, sub)
    # Per-wide-row VMEM: output row (kD * itemsize) + lane-padded f32 pos row (512 B).
    # ~4 MiB per (output + pos) block => <= ~16 MiB total double-buffered: fits the
    # default scoped VMEM on v5e (16 MiB), v6e and v7x (32 MiB) without flags.
    bytes_per_row = kD * out_itemsize + 512
    rows_cap = max(sub, ((4 * 1024 * 1024) // bytes_per_row) // sub * sub)
    ntiles_min = 2 if W_sub >= 2 * sub else 1                         # v7x: feed both TCs
    ntiles = max(ntiles_min, _cdiv(W_sub, rows_cap))
    tile_w = _round_up(_cdiv(W_sub, ntiles), sub)
    wp = ntiles * tile_w                                              # padding <= ~ntiles*sub rows
    rp = wp * k

    x_pad = jnp.pad(x_flat, (0, rp - R)) if rp != R else x_flat
    pos2d = x_pad.reshape(wp, k)

    out_wide = pl.pallas_call(
        _pe_kernel,
        out_shape=jax.ShapeDtypeStruct((wp, kD), out_dtype),
        grid=(ntiles,),
        in_specs=[
            pl.BlockSpec((tile_w, k), lambda i: (i, 0)),
            pl.BlockSpec((k, kD), lambda i: (0, 0)),
            pl.BlockSpec((1, kD), lambda i: (0, 0)),
        ],
        out_specs=pl.BlockSpec((tile_w, kD), lambda i: (i, 0)),
        compiler_params=pltpu.CompilerParams(dimension_semantics=("parallel",)),
    )(pos2d, m_tbl, phase)

    out = out_wide.reshape(rp, D)
    if rp != R:
        # TODO(synk): when rp > R this slice materializes an extra copy in XLA;
        # fuse into the consumer (jit caller) or keep the padded layout downstream.
        out = out[:R]
    return out.reshape(B, T, D)


def _reference(x, embed_dim):
    # Pure-JAX reference mirroring the PyTorch module.
    x = x.astype(jnp.float32)
    B, T = x.shape
    div_term = jnp.exp(
        jnp.arange(0, embed_dim, 2, dtype=jnp.float32) * (-math.log(10000.0) / embed_dim)
    )
    ang = x[:, :, None] * div_term[None, None, :]
    pe = jnp.zeros((B, T, embed_dim), jnp.float32)
    pe = pe.at[:, :, 0::2].set(jnp.sin(ang))
    pe = pe.at[:, :, 1::2].set(jnp.cos(ang))
    return pe


if __name__ == "__main__":
    key = jax.random.PRNGKey(0)
    B, T = 2, 8
    x = jax.random.randint(key, (B, T), 0, 100).astype(jnp.float32)

    # 1) Small D: lane-packed path (k = 4), f32 output.
    D = 32
    out = jax.block_until_ready(positional_encoding(x, D))
    ref = _reference(x, D)
    assert out.shape == (B, T, D) and out.dtype == jnp.float32
    assert jnp.allclose(out, ref, atol=5e-5, rtol=1e-5), (
        f"mismatch vs reference (D={D}), max err {jnp.max(jnp.abs(out - ref))}"
    )

    # 2) Non-power-of-two-friendly D: generalized packing path (k = 8, kD = 384).
    D2 = 48
    out2 = jax.block_until_ready(positional_encoding(x, D2))
    ref2 = _reference(x, D2)
    assert out2.shape == (B, T, D2)
    assert jnp.allclose(out2, ref2, atol=5e-5, rtol=1e-5), (
        f"mismatch vs reference (D={D2}), max err {jnp.max(jnp.abs(out2 - ref2))}"
    )

    # 3) Wide D: k = 1 path, two grid steps (megacore), zero-padding epilogue skipped.
    D3 = 256
    out3 = jax.block_until_ready(positional_encoding(x, D3))
    ref3 = _reference(x, D3)
    assert out3.shape == (B, T, D3)
    assert jnp.allclose(out3, ref3, atol=5e-5, rtol=1e-5), (
        f"mismatch vs reference (D={D3}), max err {jnp.max(jnp.abs(out3 - ref3))}"
    )

    # 4) bf16 output path (v6e/v7x write-traffic saver): f32 math, cast on store.
    out_bf = jax.block_until_ready(positional_encoding(x, D, out_dtype=jnp.bfloat16))
    assert out_bf.shape == (B, T, D) and out_bf.dtype == jnp.bfloat16
    assert jnp.allclose(out_bf.astype(jnp.float32), ref, atol=2e-2), (
        f"bf16 output mismatch, max err {jnp.max(jnp.abs(out_bf.astype(jnp.float32) - ref))}"
    )

    print("KERNEL_OK")
</pallas_src>

<mosaic_0001>
module attributes {stable_mosaic.version = 11 : i64} {
  func.func @_pe_kernel(%arg0: i32, %arg1: memref<8x4xf32, #tpu.memory_space<vmem>>, %arg2: memref<4x128xf32, #tpu.memory_space<vmem>>, %arg3: memref<1x128xf32, #tpu.memory_space<vmem>>, %arg4: memref<8x128xf32, #tpu.memory_space<vmem>>) attributes {dimension_semantics = [#tpu.dimension_semantics<parallel>], iteration_bounds = array<i64: 1>, scalar_prefetch = 0 : i64, scratch_operands = 0 : i64, tpu.core_type = #tpu.core_type<tc>, window_params = [{transform_indices = @transform_0, window_bounds = array<i64: 8, 4>}, {pipeline_mode = #tpu.pipeline_mode<synchronous>, transform_indices = @transform_1, window_bounds = array<i64: 4, 128>}, {pipeline_mode = #tpu.pipeline_mode<synchronous>, transform_indices = @transform_2, window_bounds = array<i64: 1, 128>}, {transform_indices = @transform_3, window_bounds = array<i64: 8, 128>}]} {
    %c0 = arith.constant 0 : index
    %c0_0 = arith.constant 0 : index
    %0 = vector.load %arg1[%c0, %c0_0] : memref<8x4xf32, #tpu.memory_space<vmem>>, vector<8x4xf32>
    %c0_1 = arith.constant 0 : index
    %c0_2 = arith.constant 0 : index
    %1 = vector.load %arg2[%c0_1, %c0_2] : memref<4x128xf32, #tpu.memory_space<vmem>>, vector<4x128xf32>
    %c0_3 = arith.constant 0 : index
    %c0_4 = arith.constant 0 : index
    %2 = vector.load %arg3[%c0_3, %c0_4] : memref<1x128xf32, #tpu.memory_space<vmem>>, vector<1x128xf32>
    %3 = vector.extract_strided_slice %0 {offsets = [0, 0], sizes = [8, 1], strides = [1, 1]} : vector<8x4xf32> to vector<8x1xf32>
    %4 = vector.extract_strided_slice %1 {offsets = [0, 0], sizes = [1, 128], strides = [1, 1]} : vector<4x128xf32> to vector<1x128xf32>
    %5 = vector.broadcast %3 : vector<8x1xf32> to vector<8x128xf32>
    %6 = vector.broadcast %4 : vector<1x128xf32> to vector<8x128xf32>
    %7 = arith.mulf %5, %6 : vector<8x128xf32>
    %8 = vector.broadcast %2 : vector<1x128xf32> to vector<8x128xf32>
    %9 = arith.addf %8, %7 : vector<8x128xf32>
    %10 = vector.extract_strided_slice %0 {offsets = [0, 1], sizes = [8, 1], strides = [1, 1]} : vector<8x4xf32> to vector<8x1xf32>
    %11 = vector.extract_strided_slice %1 {offsets = [1, 0], sizes = [1, 128], strides = [1, 1]} : vector<4x128xf32> to vector<1x128xf32>
    %12 = vector.broadcast %10 : vector<8x1xf32> to vector<8x128xf32>
    %13 = vector.broadcast %11 : vector<1x128xf32> to vector<8x128xf32>
    %14 = arith.mulf %12, %13 : vector<8x128xf32>
    %15 = arith.addf %9, %14 : vector<8x128xf32>
    %16 = vector.extract_strided_slice %0 {offsets = [0, 2], sizes = [8, 1], strides = [1, 1]} : vector<8x4xf32> to vector<8x1xf32>
    %17 = vector.extract_strided_slice %1 {offsets = [2, 0], sizes = [1, 128], strides = [1, 1]} : vector<4x128xf32> to vector<1x128xf32>
    %18 = vector.broadcast %16 : vector<8x1xf32> to vector<8x128xf32>
    %19 = vector.broadcast %17 : vector<1x128xf32> to vector<8x128xf32>
    %20 = arith.mulf %18, %19 : vector<8x128xf32>
    %21 = arith.addf %15, %20 : vector<8x128xf32>
    %22 = vector.extract_strided_slice %0 {offsets = [0, 3], sizes = [8, 1], strides = [1, 1]} : vector<8x4xf32> to vector<8x1xf32>
    %23 = vector.extract_strided_slice %1 {offsets = [3, 0], sizes = [1, 128], strides = [1, 1]} : vector<4x128xf32> to vector<1x128xf32>
    %24 = vector.broadcast %22 : vector<8x1xf32> to vector<8x128xf32>
    %25 = vector.broadcast %23 : vector<1x128xf32> to vector<8x128xf32>
    %26 = arith.mulf %24, %25 : vector<8x128xf32>
    %27 = arith.addf %21, %26 : vector<8x128xf32>
    %28 = math.sin %27 : vector<8x128xf32>
    %c0_5 = arith.constant 0 : index
    %c0_6 = arith.constant 0 : index
    %29 = vector.load %arg4[%c0_5, %c0_6] : memref<8x128xf32, #tpu.memory_space<vmem>>, vector<8x128xf32>
    tpu.vector_store %arg4[%c0_5, %c0_6], %28 {strides = array<i32>} : memref<8x128xf32, #tpu.memory_space<vmem>>, vector<8x128xf32>,
    return
  }
  func.func @transform_0(%arg0: i32) -> (i32, i32) {
    %c0_i32 = arith.constant 0 : i32
    %c0_i32_0 = arith.constant 0 : i32
    return %arg0, %c0_i32 : i32, i32
  }
  func.func @transform_1(%arg0: i32) -> (i32, i32) {
    %c0_i32 = arith.constant 0 : i32
    %c0_i32_0 = arith.constant 0 : i32
    %c0_i32_1 = arith.constant 0 : i32
    return %c0_i32, %c0_i32_0 : i32, i32
  }
  func.func @transform_2(%arg0: i32) -> (i32, i32) {
    %c0_i32 = arith.constant 0 : i32
    %c0_i32_0 = arith.constant 0 : i32
    %c0_i32_1 = arith.constant 0 : i32
    return %c0_i32, %c0_i32_0 : i32, i32
  }
  func.func @transform_3(%arg0: i32) -> (i32, i32) {
    %c0_i32 = arith.constant 0 : i32
    %c0_i32_0 = arith.constant 0 : i32
    return %arg0, %c0_i32 : i32, i32
  }
}

</mosaic_0001>

<llo_original>
// kernel: tpu_custom_call.1
$region0: #{tpu_custom_call.1}
  #allocation0 [shape = 'u32[]', space=smem, size = 0x4, offset = 0x4, fixed_abs, tag = 'smem constant byte address 0x4 - core index']
  #allocation1 [shape = 'u32[144,128]{1,0:T(1,128)}', space=vmem, size = 0x12000, scoped, tag = 'internal scratch']
  %s0 = inlined_call_operand.vmem [shape: f32[8,4], index: 0, kind: input, shape index: {}]
  %s1 = inlined_call_operand.vmem [shape: f32[4,128], index: 1, kind: input, shape index: {}]
  %s2 = inlined_call_operand.vmem [shape: f32[1,128], index: 2, kind: input, shape index: {}]
  %s3 = inlined_call_operand.hbm [shape: f32[8,128], index: 3, kind: output, shape index: {}]
  %s4 = sld [smem:[#allocation0]]
  $region22: #{tpu_custom_call.1} parent=0
    _
  %s6 = ssub.s32 1, %s4
  %s7 = scalar_select 0, %s6, %s4
  $region1: #{tpu_custom_call.1} parent=0
    #allocation2 [shape = 'u8[4096]{0}', space=vmem, size = 0x1000, scoped, tag = 'output window, operand 0, single buffered']
    #allocation3 [shape = 's32[1]{0}', space=sflag, size = 0x4, scoped, tag = 'scoped memory for tpu_custom_call.1']
    %8 = vsyncpa [#allocation3], 0
    // Predicated region
    $region2: #{tpu_custom_call.1} parent=1 // pred_check
      _
    $region3: #{tpu_custom_call.1} parent=1 // pred_check_branch
      %10 = sbr.rel (0) target = $region5
    $region4: #{tpu_custom_call.1} parent=1 // pred_region
      _
    $region5: #{tpu_custom_call.1} parent=1 // pred_fallthru
      _
    // Predicated region
    $region6: #{tpu_custom_call.1} parent=1 // pred_check
      _
    $region7: #{tpu_custom_call.1} parent=1 // pred_check_branch
      %12 = sbr.rel (0) target = $region9
    $region8: #{tpu_custom_call.1} parent=1 // pred_region
      _
    $region9: #{tpu_custom_call.1} parent=1 // pred_fallthru
      _
    // Predicated region
    $region10: #{tpu_custom_call.1} parent=1 // pred_check
      _
    $region11: #{tpu_custom_call.1} parent=1 // pred_check_branch
      %14 = sbr.rel (0) target = $region13
    $region12: #{tpu_custom_call.1} parent=1 // pred_region
      _
    $region13: #{tpu_custom_call.1} parent=1 // pred_fallthru
      _
    %v15 = vld [vmem:[%s0] sm:$0xff]
    %v16 = vld [vmem:[%s1] sm:$0xf]
    %v17 = vld [vmem:[%s2] sm:$0x1]
    %19 = vset.pattern.permute.xlu0 0
    %20 = vperm.xlu0 %19, %v15
    %v21 = vpop.permute.xlu0 %20
    %v23 = vlaneseq
    %v24 = vshrl.u32 %v23, 7
    %v25 = vsub.s32 0, %v24
    %v26 = vrot.slane %v16, %v25
    %v27 = vmul.f32 %v21, %v26
    %v29 = vlaneseq
    %v30 = vshrl.u32 %v29, 7
    %v31 = vsub.s32 0, %v30
    %v32 = vrot.slane %v17, %v31
    %v34 = vadd.f32 %v32, %v27
    %35 = vset.pattern.permute.xlu0 1
    %36 = vperm.xlu0 %35, %v15
    %v37 = vpop.permute.xlu0 %36
    %v39 = vlaneseq
    %v40 = vshrl.u32 %v39, 7
    %v41 = vsub.s32 1, %v40
    %v42 = vrot.slane %v16, %v41
    %v43 = vmul.f32 %v37, %v42
    %v44 = vadd.f32 %v34, %v43
    %45 = vset.pattern.permute.xlu0 2
    %46 = vperm.xlu0 %45, %v15
    %v47 = vpop.permute.xlu0 %46
    %v49 = vlaneseq
    %v50 = vshrl.u32 %v49, 7
    %v51 = vsub.s32 2, %v50
    %v52 = vrot.slane %v16, %v51
    %v53 = vmul.f32 %v47, %v52
    %v54 = vadd.f32 %v44, %v53
    %55 = vset.pattern.permute.xlu0 3
    %56 = vperm.xlu0 %55, %v15
    %v57 = vpop.permute.xlu0 %56
    %v59 = vlaneseq
    %v60 = vshrl.u32 %v59, 7
    %v61 = vsub.s32 3, %v60
    %v62 = vrot.slane %v16, %v61
    %v63 = vmul.f32 %v57, %v62
    %v64 = vadd.f32 %v54, %v63
    %v65 = vand.u32 2147483647, %v64
    %vm66 = vcmp.le.f32.partialorder %v65, 0.7853982
    %vm67 = vcmp.lt.s32.totalorder %v64, 0
    %v68 = vand.u32 %v64, 2139095040
    %v69 = vshrl.u32 %v68, 23
    %v70 = vsub.s32 %v69, 127
    %v71 = vand.u32 2147483647, %v64
    %v72 = vand.u32 %v71, 8388607
    %v73 = vor.u32 %v72, 8388608
    %v74 = vsub.s32 0, %v73
    %v75 = vadd.s32 %v70, 1
    %vm76 = vcmp.gt.s32.totalorder %v75, 0
    %v77 = vsel %vm76, %v75, 0
    %v78 = vshrl.u32 %v77, 5
    %v79 = vand.u32 %v77, 31
    %v80 = vsub.s32 32, %v79
    %v81 = vshrl.u32 683565275, %v80
    %v82 = vshll.u32 683565275, %v79
    %v83 = vshrl.u32 2475754826, %v80
    %v84 = vor.u32 %v82, %v83
    %v85 = vshll.u32 2475754826, %v79
    %v86 = vshrl.u32 2131351028, %v80
    %v87 = vor.u32 %v85, %v86
    %v88 = vshll.u32 2131351028, %v79
    %v89 = vshrl.u32 2102212464, %v80
    %v90 = vor.u32 %v88, %v89
    %v91 = vshll.u32 2102212464, %v79
    %v92 = vshrl.u32 920167782, %v80
    %v93 = vor.u32 %v91, %v92
    %v94 = vshll.u32 920167782, %v79
    %v95 = vshrl.u32 1326507024, %v80
    %v96 = vor.u32 %v94, %v95
    %vm97 = vcmp.lt.s32.totalorder %v78, 1
    %vm98 = vcmp.lt.s32.totalorder %v78, 2
    %vm99 = vcmp.lt.s32.totalorder %v78, 3
    %vm100 = vcmp.lt.s32.totalorder %v78, 4
    %v101 = vsel %vm97, %v81, %v84
    %v102 = vsel %vm100, %v90, 2102212464
    %v103 = vsel %vm99, %v87, %v102
    %v104 = vsel %vm98, %v101, %v103
    %v105 = vsel %vm97, %v84, %v87
    %v106 = vsel %vm100, %v93, 920167782
    %v107 = vsel %vm99, %v90, %v106
    %v108 = vsel %vm98, %v105, %v107
    %v109 = vsel %vm97, %v87, %v90
    %v110 = vsel %vm100, %v96, 1326507024
    %v111 = vsel %vm99, %v93, %v110
    %v112 = vsel %vm98, %v109, %v111
    %v113 = vshll.u32 %v73, 8
    %v114 = vmul.u32.u64.compose %v113, %v112
    %v115 = vextract.low.u32 %v114
    %v116 = vextract.high.u32 %v114
    %v117 = vmul.u32.u64.compose %v113, %v108
    %v118 = vextract.low.u32 %v117
    %v119 = vextract.high.u32 %v117
    %v120 = vmul.u32 %v113, %v104
    %v121 = vadd.s32 %v116, %v118
    %vm122 = vc.u32 %v116, %v118
    %v123 = vadd.s32 %v119, 1
    %v124 = vsel %vm122, %v123, %v119
    %v125 = vadd.s32 %v120, %v124
    %v126 = vadd.s32 %v125, 536870912
    %v127 = vshrl.u32 %v126, 30
    %v128 = vshll.u32 %v127, 30
    %v129 = vsub.s32 %v125, %v128
    %vm130 = vcmp.lt.s32.totalorder %v129, 0
    %v131 = vsub.s32 0, %v129
    %v132 = vsel %vm130, %v131, %v129
    %v133 = vclz %v132
    %v134 = vsub.s32 %v133, 2
    %vm135 = vcmp.gt.s32.totalorder 0, %v134
    %v136 = vsel %vm135, 0, %v134
    %v137 = vsub.s32 32, %v136
    %v138 = vshll.u32 %v129, %v136
    %v139 = vshrl.u32 %v121, %v137
    %v140 = vor.u32 %v138, %v139
    %v141 = vsub.s32 4294967266, %v136
    %v142 = vadd.s32 %v141, 127
    %v143 = vshll.u32 %v142, 23
    %v144 = vor.u32 4788187, %v143
    %v145 = vand.u32 2147483647, %v144
    %v147 = vcvt.s32.f32 %v140
    %v148 = vmul.f32 %v147, %v145
    %v149 = vxor.u32 %v148, 2147483648
    %v150 = vsel %vm67, %v149, %v148
    %v151 = vsub.s32 4, %v127
    %v152 = vsel %vm67, %v151, %v127
    %v153 = vsel %vm66, %v64, %v150
    %v154 = vsel %vm66, 0, %v152
    %v155 = vcosq.f32.pop %v153
    %v156 = vsinq.f32.pop %v153
    %vm157 = vweird.f32 %v64
    %v158 = vadd.s32 %v154, 3
    %v159 = vand.u32 %v158, 3
    %vm160 = vcmp.lt.s32.totalorder %v159, 2
    %vm161 = vcmp.eq.s32.totalorder %v159, 0
    %v162 = vxor.u32 %v156, 2147483648
    %v163 = vsel %vm161, %v155, %v162
    %vm164 = vcmp.eq.s32.totalorder %v159, 2
    %v165 = vxor.u32 %v155, 2147483648
    %v166 = vsel %vm164, %v165, %v156
    %v167 = vsel %vm160, %v163, %v166
    %v168 = vsel %vm157, nan, %v167
    %169 = vst [vmem:[#allocation2] sm:$0xff] %v168
    // Predicated region
    $region14: #{tpu_custom_call.1} parent=1 // pred_check
      _
    $region15: #{tpu_custom_call.1} parent=1 // pred_check_branch
      %171 = sbr.rel (0) target = $region17
    $region16: #{tpu_custom_call.1} parent=1 // pred_region
      %s173 = ssub.s32 128, 128
      %174 = vsyncadd [#allocation3], %s173
      %s176 = sshll.u32 [#allocation2], 4
      %s177 = int_to_ptr.vmem [resolvable:$true] %s176
      %179 = dma.vmem_to_hbm [thread:$0]  %s177, 128, %s3, [#allocation3]
    $region17: #{tpu_custom_call.1} parent=1 // pred_fallthru
      _
    // Predicated region
    $region18: #{tpu_custom_call.1} parent=1 // pred_check
      _
    $region19: #{tpu_custom_call.1} parent=1 // pred_check_branch
      %181 = sbr.rel (0) target = $region21
    $region20: #{tpu_custom_call.1} parent=1 // pred_region
      %182 = dma.done [#allocation3], 128
    $region21: #{tpu_custom_call.1} parent=1 // pred_fallthru
      _
    %183 = vsyncpa [#allocation3], 1

</llo_original>
